<compile_context>
chip_gen: v7x
topology: tpu7x:2x2x1
jax: 0.10.0
libtpu: 0.0.40
codegen_flags: <defaults>
</compile_context>

<pallas_src>
import functools

import jax
import jax.numpy as jnp
from jax.experimental import pallas as pl
from jax.experimental.pallas import tpu as pltpu


def _round_up(n, m):
    return ((n + m - 1) // m) * m


def mlp_kernel(x_ref, w1_ref, b1_ref, w2_ref, b2_ref, w3_ref, b3_ref, o_ref):
    # Three MXU matmuls (f32 accumulation) + VPU bias/ReLU; all operands in VMEM.
    mm_dtype = w1_ref.dtype                      # f32 or bf16 (set by the wrapper)
    x = x_ref[...]                               # already mm_dtype (cast at HBM boundary)

    h1 = jnp.dot(x, w1_ref[...], preferred_element_type=jnp.float32) + b1_ref[...]
    h1 = jnp.maximum(h1, 0.0)

    h2 = jnp.dot(h1.astype(mm_dtype), w2_ref[...],
                 preferred_element_type=jnp.float32) + b2_ref[...]
    h2 = jnp.maximum(h2, 0.0)

    out = jnp.dot(h2.astype(mm_dtype), w3_ref[...],
                  preferred_element_type=jnp.float32) + b3_ref[...]
    o_ref[...] = out.astype(o_ref.dtype)         # true [tb, num_classes] store


@functools.partial(jax.jit, static_argnames=("tile_b", "use_bf16_matmul"))
def mlp_forward(x, params, *, tile_b=1024, use_bf16_matmul=False):
    """x: [B, input_size] -> logits: [B, num_classes] float32."""
    w1, b1, w2, b2, w3, b3 = params
    B, input_size = x.shape
    h1_dim = w1.shape[1]
    h2_dim = w2.shape[1]
    num_classes = w3.shape[1]

    # Optional bf16 MXU operands: cast x and weights ONCE here so the HBM array
    # and its DMA are bf16 (halves input read bytes). Biases / accum stay f32.
    if use_bf16_matmul:
        x = x.astype(jnp.bfloat16)
        w1, w2, w3 = (w.astype(jnp.bfloat16) for w in (w1, w2, w3))

    # Batch tiling: sublane-aligned, capped by tile_b, and sized so that there
    # are >=2 grid steps whenever B allows (v7x megacore gets both TCs busy).
    tb = min(tile_b, _round_up(pl.cdiv(B, 2), 8))
    tb = max(8, _round_up(tb, 8))
    grid = (pl.cdiv(B, tb),)                     # ragged last block is masked by Pallas

    def resident(shape):
        # Full-array block, constant index_map -> stays in VMEM across all steps.
        return pl.BlockSpec(shape, lambda i, _n=len(shape): (0,) * _n)

    # Advisory cost estimate + a VMEM budget computed from actual demand.
    flops = 2 * B * (input_size * h1_dim + h1_dim * h2_dim + h2_dim * num_classes)
    weight_bytes = sum(int(a.size) * a.dtype.itemsize for a in (w1, b1, w2, b2, w3, b3))
    tile_bytes = tb * input_size * x.dtype.itemsize + tb * num_classes * 4
    hidden_bytes = tb * (h1_dim + h2_dim) * 4
    bytes_accessed = int(x.size) * x.dtype.itemsize + B * num_classes * 4 + weight_bytes
    vmem_limit = int(2 * tile_bytes + hidden_bytes + weight_bytes + (8 << 20))

    out = pl.pallas_call(
        mlp_kernel,
        out_shape=jax.ShapeDtypeStruct((B, num_classes), jnp.float32),
        grid=grid,
        in_specs=[
            pl.BlockSpec((tb, input_size), lambda i: (i, 0)),   # x tile (pipelined)
            resident(w1.shape), resident(b1.shape),             # weights: VMEM-resident
            resident(w2.shape), resident(b2.shape),
            resident(w3.shape), resident(b3.shape),
        ],
        out_specs=pl.BlockSpec((tb, num_classes), lambda i: (i, 0)),
        compiler_params=pltpu.CompilerParams(
            dimension_semantics=("parallel",),
            vmem_limit_bytes=vmem_limit,
        ),
        cost_estimate=pl.CostEstimate(
            flops=flops, transcendentals=0, bytes_accessed=bytes_accessed
        ),
    )(x, w1, b1, w2, b2, w3, b3)

    return out


def init_params(key, input_size, num_classes):
    """Deterministic init mimicking PyTorch nn.Linear default (U(-1/sqrt(fan_in), ...))."""
    dims = [(input_size, 64), (64, 32), (32, num_classes)]
    params = []
    for fan_in, fan_out in dims:
        key, kw, kb = jax.random.split(key, 3)
        bound = 1.0 / jnp.sqrt(jnp.float32(fan_in))
        w = jax.random.uniform(kw, (fan_in, fan_out), jnp.float32, -bound, bound)
        b = jax.random.uniform(kb, (1, fan_out), jnp.float32, -bound, bound)
        params += [w, b]
    return tuple(params)


def mlp_reference(x, params):
    w1, b1, w2, b2, w3, b3 = params
    h1 = jnp.maximum(x @ w1 + b1, 0.0)
    h2 = jnp.maximum(h1 @ w2 + b2, 0.0)
    return h2 @ w3 + b3


if __name__ == "__main__":
    B = 8
    input_size = 16
    num_classes = 10

    key = jax.random.PRNGKey(0)
    key, kx = jax.random.split(key)
    x = jax.random.normal(kx, (B, input_size), jnp.float32)
    params = init_params(key, input_size, num_classes)

    ref = mlp_reference(x, params)

    # f32 MXU path (default; v5e-safe) — tight-tolerance check.
    out = jax.block_until_ready(mlp_forward(x, params, use_bf16_matmul=False))
    assert out.shape == (B, num_classes)
    assert jnp.allclose(out, ref, atol=1e-5, rtol=1e-5)

    # bf16 MXU path (v6e/v7x fast path: bf16 x/W DMAs, f32 accumulation).
    out_bf16 = jax.block_until_ready(mlp_forward(x, params, use_bf16_matmul=True))
    assert out_bf16.shape == (B, num_classes)
    assert jnp.allclose(out_bf16, ref, atol=2e-2, rtol=2e-2)

    print("KERNEL_OK")
</pallas_src>

<mosaic_0001>
module attributes {stable_mosaic.version = 11 : i64} {
  func.func @mlp_kernel(%arg0: i32, %arg1: memref<8x16xf32, #tpu.memory_space<vmem>>, %arg2: memref<16x64xf32, #tpu.memory_space<vmem>>, %arg3: memref<1x64xf32, #tpu.memory_space<vmem>>, %arg4: memref<64x32xf32, #tpu.memory_space<vmem>>, %arg5: memref<1x32xf32, #tpu.memory_space<vmem>>, %arg6: memref<32x10xf32, #tpu.memory_space<vmem>>, %arg7: memref<1x10xf32, #tpu.memory_space<vmem>>, %arg8: memref<8x10xf32, #tpu.memory_space<vmem>>) attributes {dimension_semantics = [#tpu.dimension_semantics<parallel>], iteration_bounds = array<i64: 1>, scalar_prefetch = 0 : i64, scratch_operands = 0 : i64, tpu.core_type = #tpu.core_type<tc>, window_params = [{transform_indices = @transform_0, window_bounds = array<i64: 8, 16>}, {pipeline_mode = #tpu.pipeline_mode<synchronous>, transform_indices = @transform_1, window_bounds = array<i64: 16, 64>}, {pipeline_mode = #tpu.pipeline_mode<synchronous>, transform_indices = @transform_2, window_bounds = array<i64: 1, 64>}, {pipeline_mode = #tpu.pipeline_mode<synchronous>, transform_indices = @transform_3, window_bounds = array<i64: 64, 32>}, {pipeline_mode = #tpu.pipeline_mode<synchronous>, transform_indices = @transform_4, window_bounds = array<i64: 1, 32>}, {pipeline_mode = #tpu.pipeline_mode<synchronous>, transform_indices = @transform_5, window_bounds = array<i64: 32, 10>}, {pipeline_mode = #tpu.pipeline_mode<synchronous>, transform_indices = @transform_6, window_bounds = array<i64: 1, 10>}, {transform_indices = @transform_7, window_bounds = array<i64: 8, 10>}]} {
    %c0 = arith.constant 0 : index
    %c0_0 = arith.constant 0 : index
    %0 = vector.load %arg1[%c0, %c0_0] : memref<8x16xf32, #tpu.memory_space<vmem>>, vector<8x16xf32>
    %c0_1 = arith.constant 0 : index
    %c0_2 = arith.constant 0 : index
    %1 = vector.load %arg2[%c0_1, %c0_2] : memref<16x64xf32, #tpu.memory_space<vmem>>, vector<16x64xf32>
    %cst = arith.constant dense<0.000000e+00> : vector<8x64xf32>
    %2 = tpu.matmul %0, %1, %cst {dimension_numbers = #tpu.dot_dimension_numbers<[1], [0], [0], [1], [0, 0, 1, 1], [], []>} : vector<8x16xf32>, vector<16x64xf32>, vector<8x64xf32> -> vector<8x64xf32>
    %c0_3 = arith.constant 0 : index
    %c0_4 = arith.constant 0 : index
    %3 = vector.load %arg3[%c0_3, %c0_4] : memref<1x64xf32, #tpu.memory_space<vmem>>, vector<1x64xf32>
    %4 = vector.broadcast %3 : vector<1x64xf32> to vector<8x64xf32>
    %5 = arith.addf %2, %4 : vector<8x64xf32>
    %cst_5 = arith.constant 0.000000e+00 : f32
    %6 = vector.broadcast %cst_5 : f32 to vector<8x64xf32>
    %7 = arith.maximumf %5, %6 : vector<8x64xf32>
    %c0_6 = arith.constant 0 : index
    %c0_7 = arith.constant 0 : index
    %8 = vector.load %arg4[%c0_6, %c0_7] : memref<64x32xf32, #tpu.memory_space<vmem>>, vector<64x32xf32>
    %cst_8 = arith.constant dense<0.000000e+00> : vector<8x32xf32>
    %9 = tpu.matmul %7, %8, %cst_8 {dimension_numbers = #tpu.dot_dimension_numbers<[1], [0], [0], [1], [0, 0, 1, 1], [], []>} : vector<8x64xf32>, vector<64x32xf32>, vector<8x32xf32> -> vector<8x32xf32>
    %c0_9 = arith.constant 0 : index
    %c0_10 = arith.constant 0 : index
    %10 = vector.load %arg5[%c0_9, %c0_10] : memref<1x32xf32, #tpu.memory_space<vmem>>, vector<1x32xf32>
    %11 = vector.broadcast %10 : vector<1x32xf32> to vector<8x32xf32>
    %12 = arith.addf %9, %11 : vector<8x32xf32>
    %cst_11 = arith.constant 0.000000e+00 : f32
    %13 = vector.broadcast %cst_11 : f32 to vector<8x32xf32>
    %14 = arith.maximumf %12, %13 : vector<8x32xf32>
    %c0_12 = arith.constant 0 : index
    %c0_13 = arith.constant 0 : index
    %15 = vector.load %arg6[%c0_12, %c0_13] : memref<32x10xf32, #tpu.memory_space<vmem>>, vector<32x10xf32>
    %cst_14 = arith.constant dense<0.000000e+00> : vector<8x10xf32>
    %16 = tpu.matmul %14, %15, %cst_14 {dimension_numbers = #tpu.dot_dimension_numbers<[1], [0], [0], [1], [0, 0, 1, 1], [], []>} : vector<8x32xf32>, vector<32x10xf32>, vector<8x10xf32> -> vector<8x10xf32>
    %c0_15 = arith.constant 0 : index
    %c0_16 = arith.constant 0 : index
    %17 = vector.load %arg7[%c0_15, %c0_16] : memref<1x10xf32, #tpu.memory_space<vmem>>, vector<1x10xf32>
    %18 = vector.broadcast %17 : vector<1x10xf32> to vector<8x10xf32>
    %19 = arith.addf %16, %18 : vector<8x10xf32>
    %c0_17 = arith.constant 0 : index
    %c0_18 = arith.constant 0 : index
    %20 = vector.load %arg8[%c0_17, %c0_18] : memref<8x10xf32, #tpu.memory_space<vmem>>, vector<8x10xf32>
    tpu.vector_store %arg8[%c0_17, %c0_18], %19 {strides = array<i32>} : memref<8x10xf32, #tpu.memory_space<vmem>>, vector<8x10xf32>,
    return
  }
  func.func @transform_0(%arg0: i32) -> (i32, i32) {
    %c0_i32 = arith.constant 0 : i32
    %c0_i32_0 = arith.constant 0 : i32
    return %arg0, %c0_i32 : i32, i32
  }
  func.func @transform_1(%arg0: i32) -> (i32, i32) {
    %c0_i32 = arith.constant 0 : i32
    %c0_i32_0 = arith.constant 0 : i32
    %c0_i32_1 = arith.constant 0 : i32
    return %c0_i32, %c0_i32_0 : i32, i32
  }
  func.func @transform_2(%arg0: i32) -> (i32, i32) {
    %c0_i32 = arith.constant 0 : i32
    %c0_i32_0 = arith.constant 0 : i32
    %c0_i32_1 = arith.constant 0 : i32
    return %c0_i32, %c0_i32_0 : i32, i32
  }
  func.func @transform_3(%arg0: i32) -> (i32, i32) {
    %c0_i32 = arith.constant 0 : i32
    %c0_i32_0 = arith.constant 0 : i32
    %c0_i32_1 = arith.constant 0 : i32
    return %c0_i32, %c0_i32_0 : i32, i32
  }
  func.func @transform_4(%arg0: i32) -> (i32, i32) {
    %c0_i32 = arith.constant 0 : i32
    %c0_i32_0 = arith.constant 0 : i32
    %c0_i32_1 = arith.constant 0 : i32
    return %c0_i32, %c0_i32_0 : i32, i32
  }
  func.func @transform_5(%arg0: i32) -> (i32, i32) {
    %c0_i32 = arith.constant 0 : i32
    %c0_i32_0 = arith.constant 0 : i32
    %c0_i32_1 = arith.constant 0 : i32
    return %c0_i32, %c0_i32_0 : i32, i32
  }
  func.func @transform_6(%arg0: i32) -> (i32, i32) {
    %c0_i32 = arith.constant 0 : i32
    %c0_i32_0 = arith.constant 0 : i32
    %c0_i32_1 = arith.constant 0 : i32
    return %c0_i32, %c0_i32_0 : i32, i32
  }
  func.func @transform_7(%arg0: i32) -> (i32, i32) {
    %c0_i32 = arith.constant 0 : i32
    %c0_i32_0 = arith.constant 0 : i32
    return %arg0, %c0_i32 : i32, i32
  }
}

</mosaic_0001>

<llo_original>
// kernel: mlp_forward.1
$region0: #{mlp_forward.1}
  #allocation0 [shape = 'u32[]', space=smem, size = 0x4, offset = 0x4, fixed_abs, tag = 'smem constant byte address 0x4 - core index']
  #allocation1 [shape = 'u32[144,128]{1,0:T(1,128)}', space=vmem, size = 0x12000, scoped, tag = 'internal scratch']
  %s0 = inlined_call_operand.vmem [shape: f32[8,16], index: 0, kind: input, shape index: {}]
  %s1 = inlined_call_operand.vmem [shape: f32[16,64], index: 1, kind: input, shape index: {}]
  %s2 = inlined_call_operand.vmem [shape: f32[1,64], index: 2, kind: input, shape index: {}]
  %s3 = inlined_call_operand.vmem [shape: f32[64,32], index: 3, kind: input, shape index: {}]
  %s4 = inlined_call_operand.vmem [shape: f32[1,32], index: 4, kind: input, shape index: {}]
  %s5 = inlined_call_operand.vmem [shape: f32[32,10], index: 5, kind: input, shape index: {}]
  %s6 = inlined_call_operand.vmem [shape: f32[1,10], index: 6, kind: input, shape index: {}]
  %s7 = inlined_call_operand.hbm [shape: f32[8,10], index: 7, kind: output, shape index: {}]
  %s8 = sld [smem:[#allocation0]]
  $region38: #{mlp_forward.1} parent=0
    _
  %s10 = ssub.s32 1, %s8
  %s11 = scalar_select 0, %s10, %s8
  $region1: #{mlp_forward.1} parent=0
    #allocation2 [shape = 'u8[4096]{0}', space=vmem, size = 0x1000, scoped, tag = 'output window, operand 0, single buffered']
    #allocation3 [shape = 's32[1]{0}', space=sflag, size = 0x4, scoped, tag = 'scoped memory for mlp_forward.1']
    %12 = vsyncpa [#allocation3], 0
    // Predicated region
    $region2: #{mlp_forward.1} parent=1 // pred_check
      _
    $region3: #{mlp_forward.1} parent=1 // pred_check_branch
      %14 = sbr.rel (0) target = $region5
    $region4: #{mlp_forward.1} parent=1 // pred_region
      _
    $region5: #{mlp_forward.1} parent=1 // pred_fallthru
      _
    // Predicated region
    $region6: #{mlp_forward.1} parent=1 // pred_check
      _
    $region7: #{mlp_forward.1} parent=1 // pred_check_branch
      %16 = sbr.rel (0) target = $region9
    $region8: #{mlp_forward.1} parent=1 // pred_region
      _
    $region9: #{mlp_forward.1} parent=1 // pred_fallthru
      _
    // Predicated region
    $region10: #{mlp_forward.1} parent=1 // pred_check
      _
    $region11: #{mlp_forward.1} parent=1 // pred_check_branch
      %18 = sbr.rel (0) target = $region13
    $region12: #{mlp_forward.1} parent=1 // pred_region
      _
    $region13: #{mlp_forward.1} parent=1 // pred_fallthru
      _
    // Predicated region
    $region14: #{mlp_forward.1} parent=1 // pred_check
      _
    $region15: #{mlp_forward.1} parent=1 // pred_check_branch
      %20 = sbr.rel (0) target = $region17
    $region16: #{mlp_forward.1} parent=1 // pred_region
      _
    $region17: #{mlp_forward.1} parent=1 // pred_fallthru
      _
    // Predicated region
    $region18: #{mlp_forward.1} parent=1 // pred_check
      _
    $region19: #{mlp_forward.1} parent=1 // pred_check_branch
      %22 = sbr.rel (0) target = $region21
    $region20: #{mlp_forward.1} parent=1 // pred_region
      _
    $region21: #{mlp_forward.1} parent=1 // pred_fallthru
      _
    // Predicated region
    $region22: #{mlp_forward.1} parent=1 // pred_check
      _
    $region23: #{mlp_forward.1} parent=1 // pred_check_branch
      %24 = sbr.rel (0) target = $region25
    $region24: #{mlp_forward.1} parent=1 // pred_region
      _
    $region25: #{mlp_forward.1} parent=1 // pred_fallthru
      _
    // Predicated region
    $region26: #{mlp_forward.1} parent=1 // pred_check
      _
    $region27: #{mlp_forward.1} parent=1 // pred_check_branch
      %26 = sbr.rel (0) target = $region29
    $region28: #{mlp_forward.1} parent=1 // pred_region
      _
    $region29: #{mlp_forward.1} parent=1 // pred_fallthru
      _
    %v27 = vld [vmem:[%s0] sm:$0xff]
    %v28 = vld [vmem:[%s1] sm:$0xff]
    %v29 = vld [vmem:[%s1 + $0x8] sm:$0xff]
    %v30 = vld [vmem:[%s2] sm:$0x1]
    %v32 = vlaneseq
    %v33 = vshrl.u32 %v32, 7
    %v34 = vsub.s32 0, %v33
    %v35 = vrot.slane %v30, %v34
    %vm37 = vcmask 130048
    %v39 = vsel %vm37, %v27, 0
    %41 = vmatprep.subr.mxu0 0.0
    %42 = vmatpush1.msra.mxu0 %v28
    %43 = vmatprep.subr.mxu0 0.0
    %44 = vmatpush1.msra.mxu0 %v29
    %45 = vmatprep.subr.mxu0 0.0
    %46 = vmatpush1.msra.mxu0 0.0
    %47 = vmatprep.subr.mxu0 0.0
    %48 = vmatpush1.msra.mxu0 0.0
    %49 = vmatprep.subr.mxu0 0.0
    %50 = vmatpush1.msra.mxu0 0.0
    %51 = vmatprep.subr.mxu0 0.0
    %52 = vmatpush1.msra.mxu0 0.0
    %53 = vmatprep.subr.mxu0 0.0
    %54 = vmatpush1.msra.mxu0 0.0
    %55 = vmatprep.subr.mxu0 0.0
    %56 = vmatpush1.msra.mxu0 0.0
    %57 = vmatprep.subr.mxu0 0.0
    %58 = vmatpush1.msra.mxu0 0.0
    %59 = vmatprep.subr.mxu0 0.0
    %60 = vmatpush1.msra.mxu0 0.0
    %61 = vmatprep.subr.mxu0 0.0
    %62 = vmatpush1.msra.mxu0 0.0
    %63 = vmatprep.subr.mxu0 0.0
    %64 = vmatpush1.msra.mxu0 0.0
    %65 = vmatprep.subr.mxu0 0.0
    %66 = vmatpush1.msra.mxu0 0.0
    %67 = vmatprep.subr.mxu0 0.0
    %68 = vmatpush1.msra.mxu0 0.0
    %69 = vmatprep.subr.mxu0 0.0
    %70 = vmatpush1.msra.mxu0 0.0
    %71 = vmatprep.subr.mxu0 0.0
    %72 = vmatpush1.msra.mxu0 0.0
    %73 = vmatprep.subr.mxu0 0.0
    %74 = vmatpush1.msra.mxu0 0.0
    %75 = vmatprep.subr.mxu0 0.0
    %76 = vmatpush1.msra.mxu0 0.0
    %77 = vmatprep.subr.mxu0 0.0
    %78 = vmatpush1.msra.mxu0 0.0
    %79 = vmatprep.subr.mxu0 0.0
    %80 = vmatpush1.msra.mxu0 0.0
    %81 = vmatprep.subr.mxu0 0.0
    %82 = vmatpush1.msra.mxu0 0.0
    %83 = vmatprep.subr.mxu0 0.0
    %84 = vmatpush1.msra.mxu0 0.0
    %85 = vmatprep.subr.mxu0 0.0
    %86 = vmatpush1.msra.mxu0 0.0
    %87 = vmatprep.subr.mxu0 0.0
    %88 = vmatpush1.msra.mxu0 0.0
    %89 = vmatprep.subr.mxu0 0.0
    %90 = vmatpush1.msra.mxu0 0.0
    %91 = vmatprep.subr.mxu0 0.0
    %92 = vmatpush1.msra.mxu0 0.0
    %93 = vmatprep.subr.mxu0 0.0
    %94 = vmatpush1.msra.mxu0 0.0
    %95 = vmatprep.subr.mxu0 0.0
    %96 = vmatpush1.msra.mxu0 0.0
    %97 = vmatprep.subr.mxu0 0.0
    %98 = vmatpush1.msra.mxu0 0.0
    %99 = vmatprep.subr.mxu0 0.0
    %100 = vmatpush1.msra.mxu0 0.0
    %101 = vmatprep.subr.mxu0 0.0
    %102 = vmatpush1.msra.mxu0 0.0
    %103 = vmatprep.subr.mxu0 0.0
    %104 = vmatpush1.msra.mxu0 0.0
    %105 = vmatprep.mubr.f32.mxu0 0.0
    %106 = vmatmul.mubr.f32.gmra.mrb[0].mxu0 %v39
    %v107 = vpop.f32.mrb[0].mxu0
    %v108 = vadd.f32 %v35, %v107
    %v109 = vpop.f32.mrb[0].mxu0
    %110 = vdwg.mxu0
    %v111 = vmax.f32 %v108, 0.0
    %v112 = vld [vmem:[%s3] sm:$0xff]
    %v113 = vld [vmem:[%s3 + $0x8] sm:$0xff]
    %v114 = vld [vmem:[%s3 + $0x10] sm:$0xff]
    %v115 = vld [vmem:[%s3 + $0x18] sm:$0xff]
    %v116 = vld [vmem:[%s3 + $0x20] sm:$0xff]
    %v117 = vld [vmem:[%s3 + $0x28] sm:$0xff]
    %v118 = vld [vmem:[%s3 + $0x30] sm:$0xff]
    %v119 = vld [vmem:[%s3 + $0x38] sm:$0xff]
    %v120 = vld [vmem:[%s4] sm:$0x1]
    %v122 = vlaneseq
    %v123 = vshrl.u32 %v122, 7
    %v124 = vsub.s32 0, %v123
    %v125 = vrot.slane %v120, %v124
    %vm127 = vcmask 523264
    %v129 = vsel %vm127, %v111, 0
    %131 = vmatprep.subr.mxu0 0.0
    %132 = vmatpush1.msra.mxu0 %v112
    %133 = vmatprep.subr.mxu0 0.0
    %134 = vmatpush1.msra.mxu0 %v113
    %135 = vmatprep.subr.mxu0 0.0
    %136 = vmatpush1.msra.mxu0 %v114
    %137 = vmatprep.subr.mxu0 0.0
    %138 = vmatpush1.msra.mxu0 %v115
    %139 = vmatprep.subr.mxu0 0.0
    %140 = vmatpush1.msra.mxu0 %v116
    %141 = vmatprep.subr.mxu0 0.0
    %142 = vmatpush1.msra.mxu0 %v117
    %143 = vmatprep.subr.mxu0 0.0
    %144 = vmatpush1.msra.mxu0 %v118
    %145 = vmatprep.subr.mxu0 0.0
    %146 = vmatpush1.msra.mxu0 %v119
    %147 = vmatprep.subr.mxu0 0.0
    %148 = vmatpush1.msra.mxu0 0.0
    %149 = vmatprep.subr.mxu0 0.0
    %150 = vmatpush1.msra.mxu0 0.0
    %151 = vmatprep.subr.mxu0 0.0
    %152 = vmatpush1.msra.mxu0 0.0
    %153 = vmatprep.subr.mxu0 0.0
    %154 = vmatpush1.msra.mxu0 0.0
    %155 = vmatprep.subr.mxu0 0.0
    %156 = vmatpush1.msra.mxu0 0.0
    %157 = vmatprep.subr.mxu0 0.0
    %158 = vmatpush1.msra.mxu0 0.0
    %159 = vmatprep.subr.mxu0 0.0
    %160 = vmatpush1.msra.mxu0 0.0
    %161 = vmatprep.subr.mxu0 0.0
    %162 = vmatpush1.msra.mxu0 0.0
    %163 = vmatprep.subr.mxu0 0.0
    %164 = vmatpush1.msra.mxu0 0.0
    %165 = vmatprep.subr.mxu0 0.0
    %166 = vmatpush1.msra.mxu0 0.0
    %167 = vmatprep.subr.mxu0 0.0
    %168 = vmatpush1.msra.mxu0 0.0
    %169 = vmatprep.subr.mxu0 0.0
    %170 = vmatpush1.msra.mxu0 0.0
    %171 = vmatprep.subr.mxu0 0.0
    %172 = vmatpush1.msra.mxu0 0.0
    %173 = vmatprep.subr.mxu0 0.0
    %174 = vmatpush1.msra.mxu0 0.0
    %175 = vmatprep.subr.mxu0 0.0
    %176 = vmatpush1.msra.mxu0 0.0
    %177 = vmatprep.subr.mxu0 0.0
    %178 = vmatpush1.msra.mxu0 0.0
    %179 = vmatprep.subr.mxu0 0.0
    %180 = vmatpush1.msra.mxu0 0.0
    %181 = vmatprep.subr.mxu0 0.0
    %182 = vmatpush1.msra.mxu0 0.0
    %183 = vmatprep.subr.mxu0 0.0
    %184 = vmatpush1.msra.mxu0 0.0
    %185 = vmatprep.subr.mxu0 0.0
    %186 = vmatpush1.msra.mxu0 0.0
    %187 = vmatprep.subr.mxu0 0.0
    %188 = vmatpush1.msra.mxu0 0.0
    %189 = vmatprep.subr.mxu0 0.0
    %190 = vmatpush1.msra.mxu0 0.0
    %191 = vmatprep.subr.mxu0 0.0
    %192 = vmatpush1.msra.mxu0 0.0
    %193 = vmatprep.subr.mxu0 0.0
    %194 = vmatpush1.msra.mxu0 0.0
    %195 = vmatprep.mubr.f32.mxu0 0.0
    %196 = vmatmul.mubr.f32.gmra.mrb[0].mxu0 %v129
    %v197 = vpop.f32.mrb[0].mxu0
    %v198 = vadd.f32 %v125, %v197
    %v199 = vpop.f32.mrb[0].mxu0
    %200 = vdwg.mxu0
    %v201 = vmax.f32 %v198, 0.0
    %v202 = vld [vmem:[%s5] sm:$0xff]
    %v203 = vld [vmem:[%s5 + $0x8] sm:$0xff]
    %v204 = vld [vmem:[%s5 + $0x10] sm:$0xff]
    %v205 = vld [vmem:[%s5 + $0x18] sm:$0xff]
    %v206 = vld [vmem:[%s6] sm:$0x1]
    %v208 = vlaneseq
    %v209 = vshrl.u32 %v208, 7
    %v210 = vsub.s32 0, %v209
    %v211 = vrot.slane %v206, %v210
    %vm213 = vcmask 261120
    %v215 = vsel %vm213, %v201, 0
    %217 = vmatprep.subr.mxu0 0.0
    %218 = vmatpush1.msra.mxu0 %v202
    %219 = vmatprep.subr.mxu0 0.0
    %220 = vmatpush1.msra.mxu0 %v203
    %221 = vmatprep.subr.mxu0 0.0
    %222 = vmatpush1.msra.mxu0 %v204
    %223 = vmatprep.subr.mxu0 0.0
    %224 = vmatpush1.msra.mxu0 %v205
    %225 = vmatprep.subr.mxu0 0.0
    %226 = vmatpush1.msra.mxu0 0.0
    %227 = vmatprep.subr.mxu0 0.0
    %228 = vmatpush1.msra.mxu0 0.0
    %229 = vmatprep.subr.mxu0 0.0
    %230 = vmatpush1.msra.mxu0 0.0
    %231 = vmatprep.subr.mxu0 0.0
    %232 = vmatpush1.msra.mxu0 0.0
    %233 = vmatprep.subr.mxu0 0.0
    %234 = vmatpush1.msra.mxu0 0.0
    %235 = vmatprep.subr.mxu0 0.0
    %236 = vmatpush1.msra.mxu0 0.0
    %237 = vmatprep.subr.mxu0 0.0
    %238 = vmatpush1.msra.mxu0 0.0
    %239 = vmatprep.subr.mxu0 0.0
    %240 = vmatpush1.msra.mxu0 0.0
    %241 = vmatprep.subr.mxu0 0.0
    %242 = vmatpush1.msra.mxu0 0.0
    %243 = vmatprep.subr.mxu0 0.0
    %244 = vmatpush1.msra.mxu0 0.0
    %245 = vmatprep.subr.mxu0 0.0
    %246 = vmatpush1.msra.mxu0 0.0
    %247 = vmatprep.subr.mxu0 0.0
    %248 = vmatpush1.msra.mxu0 0.0
    %249 = vmatprep.subr.mxu0 0.0
    %250 = vmatpush1.msra.mxu0 0.0
    %251 = vmatprep.subr.mxu0 0.0
    %252 = vmatpush1.msra.mxu0 0.0
    %253 = vmatprep.subr.mxu0 0.0
    %254 = vmatpush1.msra.mxu0 0.0
    %255 = vmatprep.subr.mxu0 0.0
    %256 = vmatpush1.msra.mxu0 0.0
    %257 = vmatprep.subr.mxu0 0.0
    %258 = vmatpush1.msra.mxu0 0.0
    %259 = vmatprep.subr.mxu0 0.0
    %260 = vmatpush1.msra.mxu0 0.0
    %261 = vmatprep.subr.mxu0 0.0
    %262 = vmatpush1.msra.mxu0 0.0
    %263 = vmatprep.subr.mxu0 0.0
    %264 = vmatpush1.msra.mxu0 0.0
    %265 = vmatprep.subr.mxu0 0.0
    %266 = vmatpush1.msra.mxu0 0.0
    %267 = vmatprep.subr.mxu0 0.0
    %268 = vmatpush1.msra.mxu0 0.0
    %269 = vmatprep.subr.mxu0 0.0
    %270 = vmatpush1.msra.mxu0 0.0
    %271 = vmatprep.subr.mxu0 0.0
    %272 = vmatpush1.msra.mxu0 0.0
    %273 = vmatprep.subr.mxu0 0.0
    %274 = vmatpush1.msra.mxu0 0.0
    %275 = vmatprep.subr.mxu0 0.0
    %276 = vmatpush1.msra.mxu0 0.0
    %277 = vmatprep.subr.mxu0 0.0
    %278 = vmatpush1.msra.mxu0 0.0
    %279 = vmatprep.subr.mxu0 0.0
    %280 = vmatpush1.msra.mxu0 0.0
    %281 = vmatprep.mubr.f32.mxu0 0.0
    %282 = vmatmul.mubr.f32.gmra.mrb[0].mxu0 %v215
    %v283 = vpop.f32.mrb[0].mxu0
    %v284 = vadd.f32 %v211, %v283
    %v285 = vpop.f32.mrb[0].mxu0
    %286 = vdwg.mxu0
    %vm287 = vcmask 80896
    %288 = vst.msk [vmem:[#allocation2] sm:$0xff] %vm287, %v284
    // Predicated region
    $region30: #{mlp_forward.1} parent=1 // pred_check
      _
    $region31: #{mlp_forward.1} parent=1 // pred_check_branch
      %290 = sbr.rel (0) target = $region33
    $region32: #{mlp_forward.1} parent=1 // pred_region
      %s292 = ssub.s32 128, 128
      %293 = vsyncadd [#allocation3], %s292
      %s295 = sshll.u32 [#allocation2], 4
      %s296 = int_to_ptr.vmem [resolvable:$true] %s295
      %298 = dma.vmem_to_hbm [thread:$0]  %s296, 128, %s7, [#allocation3]
    $region33: #{mlp_forward.1} parent=1 // pred_fallthru
      _
    // Predicated region
    $region34: #{mlp_forward.1} parent=1 // pred_check
      _
    $region35: #{mlp_forward.1} parent=1 // pred_check_branch
      %300 = sbr.rel (0) target = $region37
    $region36: #{mlp_forward.1} parent=1 // pred_region
      %301 = dma.done [#allocation3], 128
    $region37: #{mlp_forward.1} parent=1 // pred_fallthru
      _
    %302 = vsyncpa [#allocation3], 1

</llo_original>
